<compile_context>
chip_gen: v5e
topology: v5e:2x2
jax: 0.10.0
libtpu: 0.0.40
codegen_flags: <defaults>
</compile_context>

<pallas_src>
import functools

import jax
import jax.numpy as jnp
from jax.experimental import pallas as pl
from jax.experimental.pallas import tpu as pltpu  # noqa: F401  (CompilerParams if a batch grid is added)

# ----------------------------- configuration --------------------------------
B = 2            # batch
L = 16           # seq_len (configs.true_len)
N = 4            # num_nodes
PRED = 8         # pred_len
D_MODEL = 32
D_FF = 64
LAYER_NUMS = 2
EPS = 1e-5       # RevIN eps

BN = B * N                    # rows of the (b, n) plane = 8
DF_CAT = LAYER_NUMS * D_FF    # concatenated FFN hidden width = 128 (lane dense)
KWIDE = L * DF_CAT            # flattened (l, f) contraction width = 2048

HIGH = jax.lax.Precision.HIGHEST


# ------------------------------ fused kernel ---------------------------------
def fused_model_kernel(x_ref, ka_ref, c1t_ref, vflat_ref, alin_ref, c0_ref,
                       mavg_ref, o_ref):
    """Whole forward pass in one grid point; every intermediate is a vreg value.

    x_ref    : (BN, L)          input, rows ordered (b, n), time on lanes
    ka_ref   : (L, KWIDE)       kron(I_L, start_w @ W1cat)  (start_fc folded in)
    c1t_ref  : (1, KWIDE)       tiled (start_b @ W1cat + b1cat)
    vflat_ref: (KWIDE, PRED)    (W2cat @ Wp[l]) flattened over (l, f)
    alin_ref : (L, PRED)        LAYER_NUMS * (start_w . Wp[l, :, p])  (residual path)
    c0_ref   : (1, PRED)        all biases pushed through the projection
    mavg_ref : (B, BN)          node-averaging matrix
    o_ref    : (B, PRED)        final output (single full store)
    """
    # ---- RevIN 'norm' (affine=False, subtract_last=False): stats over time ----
    x = x_ref[...]                                          # (BN, L)
    mu = jnp.mean(x, axis=-1, keepdims=True)                # (BN, 1)
    var = jnp.mean((x - mu) ** 2, axis=-1, keepdims=True)   # biased, like RevIN
    std = jnp.sqrt(var + EPS)                               # (BN, 1)
    xn = (x - mu) / std                                     # (BN, L)

    # ---- start_fc + first FFN matmul (folded): one lane-dense matmul ----------
    z = jnp.dot(xn, ka_ref[...], preferred_element_type=jnp.float32) + c1t_ref[...]
    z = jnp.maximum(z, 0.0)                                 # (BN, KWIDE) = (8, 2048)

    # ---- second FFN matmul + residual path + projection (all folded) ----------
    proj = (jnp.dot(z, vflat_ref[...], preferred_element_type=jnp.float32)
            + jnp.dot(xn, alin_ref[...], preferred_element_type=jnp.float32)
            + c0_ref[...])                                  # (BN, PRED)

    # ---- RevIN 'denorm' + mean over nodes, single store -----------------------
    den = proj * std + mu                                   # (BN, PRED)
    o_ref[...] = jnp.dot(mavg_ref[...], den,
                         preferred_element_type=jnp.float32)  # (B, PRED)


# ------------------------------ wrapper ---------------------------------------
def model_forward(x, params):
    """x: (B, L, N) float32 -> (B, PRED) float32."""
    # Layout plumbing only (512 B): rows in (b, n) order, time L on lanes.
    x_bn_l = jnp.transpose(x, (0, 2, 1)).reshape(BN, L)

    return pl.pallas_call(
        fused_model_kernel,
        out_shape=jax.ShapeDtypeStruct((B, PRED), jnp.float32),
    )(
        x_bn_l,
        params["Ka"], params["c1t"], params["Vflat"],
        params["A_lin"], params["C0"], params["Mavg"],
    )


# --------------------------- parameters & folding -----------------------------
def init_raw_params(key):
    ks = jax.random.split(key, 8)
    f32 = jnp.float32
    return {
        # start_fc: Linear(1, d_model)
        "start_w": jax.random.normal(ks[0], (1, D_MODEL), f32) * 0.5,
        "start_b": jax.random.normal(ks[1], (1, D_MODEL), f32) * 0.1,
        # per-layer expert stand-in FFN weights
        "w1": jax.random.normal(ks[2], (LAYER_NUMS, D_MODEL, D_FF), f32) * (1.0 / jnp.sqrt(D_MODEL)),
        "b1": jax.random.normal(ks[3], (LAYER_NUMS, 1, D_FF), f32) * 0.05,
        "w2": jax.random.normal(ks[4], (LAYER_NUMS, D_FF, D_MODEL), f32) * (1.0 / jnp.sqrt(D_FF)),
        "b2": jax.random.normal(ks[5], (LAYER_NUMS, 1, D_MODEL), f32) * 0.05,
        # projection: Linear(L*D_MODEL, PRED); row index = l*D_MODEL + d (l-major,
        # matching the reference permute(0,2,1,3).reshape flattening order)
        "proj_w": jax.random.normal(ks[6], (L * D_MODEL, PRED), f32) * (1.0 / jnp.sqrt(L * D_MODEL)),
        "proj_b": jax.random.normal(ks[7], (1, PRED), f32) * 0.05,
    }


def fold_params(raw):
    """One-time algebraic folding (plain JAX, outside the kernel)."""
    f32 = jnp.float32
    w1cat = jnp.concatenate([raw["w1"][i] for i in range(LAYER_NUMS)], axis=1)  # (D_MODEL, DF_CAT)
    b1cat = jnp.concatenate([raw["b1"][i] for i in range(LAYER_NUMS)], axis=1)  # (1, DF_CAT)
    w2cat = jnp.concatenate([raw["w2"][i] for i in range(LAYER_NUMS)], axis=0)  # (DF_CAT, D_MODEL)
    b2sum = jnp.sum(raw["b2"], axis=0)                                          # (1, D_MODEL)

    # start_fc folded into the first FFN matmul
    a1 = jnp.einsum("od,df->of", raw["start_w"], w1cat, precision=HIGH)          # (1, DF_CAT)
    c1 = jnp.einsum("od,df->of", raw["start_b"], w1cat, precision=HIGH) + b1cat  # (1, DF_CAT)

    wp3 = raw["proj_w"].reshape(L, D_MODEL, PRED)                                # (L, D, PRED)

    # Ka[l, l*DF_CAT + f] = a1[f]  (block-diagonal); c1t is c1 tiled per l-block.
    Ka = jnp.kron(jnp.eye(L, dtype=f32), a1)                                     # (L, KWIDE)
    c1t = jnp.tile(c1, (1, L))                                                   # (1, KWIDE)

    # Second FFN matmul fused with the projection head: Vflat[(l*DF_CAT+f), p]
    Vflat = jnp.einsum("fd,ldp->lfp", w2cat, wp3, precision=HIGH).reshape(KWIDE, PRED)

    # Residual path (LAYER_NUMS copies of start_fc output) pushed through projection.
    A_lin = float(LAYER_NUMS) * jnp.einsum("d,ldp->lp", raw["start_w"][0], wp3,
                                           precision=HIGH)                      # (L, PRED)

    # All biases pushed through the projection, plus the projection bias.
    bias_vec = float(LAYER_NUMS) * raw["start_b"][0] + b2sum[0]                  # (D_MODEL,)
    C0 = (jnp.einsum("d,ldp->p", bias_vec, wp3, precision=HIGH)[None, :]
          + raw["proj_b"])                                                       # (1, PRED)

    # Node-mean as a tiny matmul: Mavg[b, b*N + n] = 1/N.
    Mavg = jnp.kron(jnp.eye(B, dtype=f32), jnp.ones((1, N), f32)) / float(N)     # (B, BN)

    return {"Ka": Ka, "c1t": c1t, "Vflat": Vflat, "A_lin": A_lin,
            "C0": C0, "Mavg": Mavg}


# --------------------------- pure-JAX reference -------------------------------
def reference_forward(x, raw):
    """Unfused reference of the same forward (with the same FFN stand-in)."""
    mu = jnp.mean(x, axis=1, keepdims=True)                       # (B, 1, N)
    var = jnp.mean((x - mu) ** 2, axis=1, keepdims=True)
    std = jnp.sqrt(var + EPS)
    xn = (x - mu) / std                                           # (B, L, N)

    h = xn[..., None] * raw["start_w"][0] + raw["start_b"][0]     # (B, L, N, D)
    out = float(LAYER_NUMS) * h
    for i in range(LAYER_NUMS):
        zz = jnp.maximum(
            jnp.einsum("blnd,df->blnf", h, raw["w1"][i], precision=HIGH) + raw["b1"][i, 0], 0.0)
        out = out + jnp.einsum("blnf,fd->blnd", zz, raw["w2"][i], precision=HIGH) + raw["b2"][i, 0]

    out = jnp.transpose(out, (0, 2, 1, 3)).reshape(B, N, L * D_MODEL)
    proj = jnp.einsum("bnk,kp->bnp", out, raw["proj_w"], precision=HIGH) + raw["proj_b"][0]
    proj = jnp.transpose(proj, (0, 2, 1))                         # (B, PRED, N)
    den = proj * std + mu                                         # denorm
    return jnp.mean(den, axis=-1)                                 # (B, PRED)


if __name__ == "__main__":
    key = jax.random.PRNGKey(0)
    k_x, k_p = jax.random.split(key)
    x = jax.random.normal(k_x, (B, L, N), jnp.float32)

    raw = init_raw_params(k_p)
    params = fold_params(raw)

    fwd = jax.jit(functools.partial(model_forward, params=params))
    out = fwd(x)
    jax.block_until_ready(out)

    assert out.shape == (B, PRED), out.shape
    assert out.dtype == jnp.float32
    assert bool(jnp.all(jnp.isfinite(out)))

    ref = reference_forward(x, raw)
    assert bool(jnp.allclose(out, ref, rtol=2e-2, atol=2e-2)), (out, ref)

    print("KERNEL_OK")
</pallas_src>

<mosaic_0001>
module attributes {stable_mosaic.version = 11 : i64} {
  func.func @fused_model_kernel(%arg0: memref<8x16xf32, #tpu.memory_space<vmem>>, %arg1: memref<16x2048xf32, #tpu.memory_space<vmem>>, %arg2: memref<1x2048xf32, #tpu.memory_space<vmem>>, %arg3: memref<2048x8xf32, #tpu.memory_space<vmem>>, %arg4: memref<16x8xf32, #tpu.memory_space<vmem>>, %arg5: memref<1x8xf32, #tpu.memory_space<vmem>>, %arg6: memref<2x8xf32, #tpu.memory_space<vmem>>, %arg7: memref<2x8xf32, #tpu.memory_space<vmem>>) attributes {dimension_semantics = [], scalar_prefetch = 0 : i64, scratch_operands = 0 : i64, tpu.core_type = #tpu.core_type<tc>} {
    %c0 = arith.constant 0 : index
    %c0_0 = arith.constant 0 : index
    %0 = vector.load %arg0[%c0, %c0_0] : memref<8x16xf32, #tpu.memory_space<vmem>>, vector<8x16xf32>
    %cst = arith.constant dense<0.000000e+00> : vector<8xf32>
    %1 = vector.multi_reduction <add>, %0, %cst [1] : vector<8x16xf32> to vector<8xf32>
    %2 = vector.shape_cast %1 : vector<8xf32> to vector<8x1xf32>
    %cst_1 = arith.constant 1.600000e+01 : f32
    %3 = vector.broadcast %cst_1 : f32 to vector<8x1xf32>
    %4 = arith.divf %2, %3 : vector<8x1xf32>
    %5 = vector.broadcast %4 : vector<8x1xf32> to vector<8x16xf32>
    %6 = arith.subf %0, %5 : vector<8x16xf32>
    %7 = arith.mulf %6, %6 : vector<8x16xf32>
    %cst_2 = arith.constant dense<0.000000e+00> : vector<8xf32>
    %8 = vector.multi_reduction <add>, %7, %cst_2 [1] : vector<8x16xf32> to vector<8xf32>
    %9 = vector.shape_cast %8 : vector<8xf32> to vector<8x1xf32>
    %cst_3 = arith.constant 1.600000e+01 : f32
    %10 = vector.broadcast %cst_3 : f32 to vector<8x1xf32>
    %11 = arith.divf %9, %10 : vector<8x1xf32>
    %cst_4 = arith.constant 9.99999974E-6 : f32
    %12 = vector.broadcast %cst_4 : f32 to vector<8x1xf32>
    %13 = arith.addf %11, %12 : vector<8x1xf32>
    %14 = math.sqrt %13 : vector<8x1xf32>
    %15 = vector.broadcast %4 : vector<8x1xf32> to vector<8x16xf32>
    %16 = arith.subf %0, %15 : vector<8x16xf32>
    %17 = vector.broadcast %14 : vector<8x1xf32> to vector<8x16xf32>
    %18 = arith.divf %16, %17 : vector<8x16xf32>
    %c0_5 = arith.constant 0 : index
    %c0_6 = arith.constant 0 : index
    %19 = vector.load %arg1[%c0_5, %c0_6] : memref<16x2048xf32, #tpu.memory_space<vmem>>, vector<16x2048xf32>
    %cst_7 = arith.constant dense<0.000000e+00> : vector<8x2048xf32>
    %20 = tpu.matmul %18, %19, %cst_7 {dimension_numbers = #tpu.dot_dimension_numbers<[1], [0], [0], [1], [0, 0, 1, 1], [], []>} : vector<8x16xf32>, vector<16x2048xf32>, vector<8x2048xf32> -> vector<8x2048xf32>
    %c0_8 = arith.constant 0 : index
    %c0_9 = arith.constant 0 : index
    %21 = vector.load %arg2[%c0_8, %c0_9] : memref<1x2048xf32, #tpu.memory_space<vmem>>, vector<1x2048xf32>
    %22 = vector.broadcast %21 : vector<1x2048xf32> to vector<8x2048xf32>
    %23 = arith.addf %20, %22 : vector<8x2048xf32>
    %cst_10 = arith.constant 0.000000e+00 : f32
    %24 = vector.broadcast %cst_10 : f32 to vector<8x2048xf32>
    %25 = arith.maximumf %23, %24 : vector<8x2048xf32>
    %c0_11 = arith.constant 0 : index
    %c0_12 = arith.constant 0 : index
    %26 = vector.load %arg3[%c0_11, %c0_12] : memref<2048x8xf32, #tpu.memory_space<vmem>>, vector<2048x8xf32>
    %cst_13 = arith.constant dense<0.000000e+00> : vector<8x8xf32>
    %27 = tpu.matmul %25, %26, %cst_13 {dimension_numbers = #tpu.dot_dimension_numbers<[1], [0], [0], [1], [0, 0, 1, 1], [], []>} : vector<8x2048xf32>, vector<2048x8xf32>, vector<8x8xf32> -> vector<8x8xf32>
    %c0_14 = arith.constant 0 : index
    %c0_15 = arith.constant 0 : index
    %28 = vector.load %arg4[%c0_14, %c0_15] : memref<16x8xf32, #tpu.memory_space<vmem>>, vector<16x8xf32>
    %cst_16 = arith.constant dense<0.000000e+00> : vector<8x8xf32>
    %29 = tpu.matmul %18, %28, %cst_16 {dimension_numbers = #tpu.dot_dimension_numbers<[1], [0], [0], [1], [0, 0, 1, 1], [], []>} : vector<8x16xf32>, vector<16x8xf32>, vector<8x8xf32> -> vector<8x8xf32>
    %30 = arith.addf %27, %29 : vector<8x8xf32>
    %c0_17 = arith.constant 0 : index
    %c0_18 = arith.constant 0 : index
    %31 = vector.load %arg5[%c0_17, %c0_18] : memref<1x8xf32, #tpu.memory_space<vmem>>, vector<1x8xf32>
    %32 = vector.broadcast %31 : vector<1x8xf32> to vector<8x8xf32>
    %33 = arith.addf %30, %32 : vector<8x8xf32>
    %34 = vector.broadcast %14 : vector<8x1xf32> to vector<8x8xf32>
    %35 = arith.mulf %33, %34 : vector<8x8xf32>
    %36 = vector.broadcast %4 : vector<8x1xf32> to vector<8x8xf32>
    %37 = arith.addf %35, %36 : vector<8x8xf32>
    %c0_19 = arith.constant 0 : index
    %c0_20 = arith.constant 0 : index
    %38 = vector.load %arg6[%c0_19, %c0_20] : memref<2x8xf32, #tpu.memory_space<vmem>>, vector<2x8xf32>
    %cst_21 = arith.constant dense<0.000000e+00> : vector<2x8xf32>
    %39 = tpu.matmul %38, %37, %cst_21 {dimension_numbers = #tpu.dot_dimension_numbers<[1], [0], [0], [1], [0, 0, 1, 1], [], []>} : vector<2x8xf32>, vector<8x8xf32>, vector<2x8xf32> -> vector<2x8xf32>
    %c0_22 = arith.constant 0 : index
    %c0_23 = arith.constant 0 : index
    %40 = vector.load %arg7[%c0_22, %c0_23] : memref<2x8xf32, #tpu.memory_space<vmem>>, vector<2x8xf32>
    tpu.vector_store %arg7[%c0_22, %c0_23], %39 {strides = array<i32>} : memref<2x8xf32, #tpu.memory_space<vmem>>, vector<2x8xf32>,
    return
  }
}

</mosaic_0001>

<llo_original>
// kernel: model_forward.1
$region0: #{model_forward.1}
  #allocation0 [shape = 'u32[]', space=smem, size = 0x4, offset = 0x4, fixed_abs, tag = 'smem constant byte address 0x4 - core index']
  #allocation1 [shape = 'u32[72,128]{1,0:T(1,128)}', space=vmem, size = 0x9000, scoped, tag = 'internal scratch']
  %s0 = inlined_call_operand.hbm [shape: f32[8,16], index: 0, kind: input, shape index: {}]
  %s1 = inlined_call_operand.hbm [shape: f32[16,2048], index: 1, kind: input, shape index: {}]
  %s2 = inlined_call_operand.hbm [shape: f32[1,2048], index: 2, kind: input, shape index: {}]
  %s3 = inlined_call_operand.hbm [shape: f32[2048,8], index: 3, kind: input, shape index: {}]
  %s4 = inlined_call_operand.hbm [shape: f32[16,8], index: 4, kind: input, shape index: {}]
  %s5 = inlined_call_operand.vmem [shape: f32[1,8], index: 5, kind: input, shape index: {}]
  %s6 = inlined_call_operand.vmem [shape: f32[2,8], index: 6, kind: input, shape index: {}]
  %s7 = inlined_call_operand.hbm [shape: f32[2,8], index: 7, kind: output, shape index: {}]
  %s8 = sld [smem:[#allocation0]]
  $region58: #{model_forward.1} parent=0
    _
  %s10 = ssub.s32 1, %s8
  %s11 = scalar_select 0, %s10, %s8
  $region1: #{model_forward.1} parent=0
    #allocation2 [shape = 'u8[4096]{0}', space=vmem, size = 0x1000, scoped, tag = 'input window, operand 0, single buffered']
    #allocation3 [shape = 's32[1]{0}', space=sflag, size = 0x4, scoped, tag = 'scoped memory for model_forward.1']
    #allocation4 [shape = 's32[1]{0}', space=sflag, size = 0x4, scoped, tag = 'scoped memory for model_forward.1']
    #allocation5 [shape = 'u8[131072]{0}', space=vmem, size = 0x20000, scoped, tag = 'input window, operand 1, single buffered']
    #allocation6 [shape = 's32[1]{0}', space=sflag, size = 0x4, scoped, tag = 'scoped memory for model_forward.1']
    #allocation7 [shape = 'u8[8192]{0}', space=vmem, size = 0x2000, scoped, tag = 'input window, operand 2, single buffered']
    #allocation8 [shape = 'u8[1048576]{0}', space=vmem, size = 0x100000, scoped, tag = 'input window, operand 3, single buffered']
    #allocation9 [shape = 's32[1]{0}', space=sflag, size = 0x4, scoped, tag = 'scoped memory for model_forward.1']
    #allocation10 [shape = 'u8[8192]{0}', space=vmem, size = 0x2000, scoped, tag = 'input window, operand 4, single buffered']
    #allocation11 [shape = 'u8[1024]{0}', space=vmem, size = 0x400, scoped, tag = 'output window, operand 0, single buffered']
    %12 = vsyncpa [#allocation3], 0
    %13 = vsyncpa [#allocation6], 0
    %14 = vsyncpa [#allocation9], 0
    %15 = vsyncpa [#allocation4], 0
    // Predicated region
    $region2: #{model_forward.1} parent=1 // pred_check
      _
    $region3: #{model_forward.1} parent=1 // pred_check_branch
      %17 = sbr.rel (0) target = $region5
    $region4: #{model_forward.1} parent=1 // pred_region
      %19 = vsyncadd [#allocation3], 0
      %s21 = sshll.u32 %s0, 4
      %s22 = int_to_ptr.hbm [resolvable:$true] %s21
      %s23 = sshll.u32 [#allocation2], 4
      %s24 = int_to_ptr.vmem [resolvable:$true] %s23
      %26 = dma.hbm_to_vmem [thread:$0]  %s22, 128, %s24, [#allocation3]
    $region5: #{model_forward.1} parent=1 // pred_fallthru
      _
    // Predicated region
    $region6: #{model_forward.1} parent=1 // pred_check
      _
    $region7: #{model_forward.1} parent=1 // pred_check_branch
      %28 = sbr.rel (0) target = $region9
    $region8: #{model_forward.1} parent=1 // pred_region
      %30 = vsyncadd [#allocation6], 0
      %s31 = sshll.u32 %s1, 4
      %s32 = int_to_ptr.hbm [resolvable:$true] %s31
      %s33 = sshll.u32 [#allocation5], 4
      %s34 = int_to_ptr.vmem [resolvable:$true] %s33
      %39 = dma.hbm_to_vmem [thread:$0]  %s32, 4096, %s34, [#allocation6], 2048, 2048, 128
    $region9: #{model_forward.1} parent=1 // pred_fallthru
      _
    // Predicated region
    $region10: #{model_forward.1} parent=1 // pred_check
      _
    $region11: #{model_forward.1} parent=1 // pred_check_branch
      %41 = sbr.rel (0) target = $region13
    $region12: #{model_forward.1} parent=1 // pred_region
      %43 = vsyncadd [#allocation6], 0
      %s45 = sshll.u32 %s2, 4
      %s46 = int_to_ptr.hbm [resolvable:$true] %s45
      %s47 = sshll.u32 [#allocation7], 4
      %s48 = int_to_ptr.vmem [resolvable:$true] %s47
      %50 = dma.hbm_to_vmem [thread:$0]  %s46, 256, %s48, [#allocation6]
    $region13: #{model_forward.1} parent=1 // pred_fallthru
      _
    // Predicated region
    $region14: #{model_forward.1} parent=1 // pred_check
      _
    $region15: #{model_forward.1} parent=1 // pred_check_branch
      %52 = sbr.rel (0) target = $region17
    $region16: #{model_forward.1} parent=1 // pred_region
      %54 = vsyncadd [#allocation9], 0
      %s55 = sshll.u32 %s3, 4
      %s56 = int_to_ptr.hbm [resolvable:$true] %s55
      %s57 = sshll.u32 [#allocation8], 4
      %s58 = int_to_ptr.vmem [resolvable:$true] %s57
      %63 = dma.hbm_to_vmem [thread:$0]  %s56, 32768, %s58, [#allocation9], 128, 128, 8
    $region17: #{model_forward.1} parent=1 // pred_fallthru
      _
    // Predicated region
    $region18: #{model_forward.1} parent=1 // pred_check
      _
    $region19: #{model_forward.1} parent=1 // pred_check_branch
      %65 = sbr.rel (0) target = $region21
    $region20: #{model_forward.1} parent=1 // pred_region
      %67 = vsyncadd [#allocation9], 0
      %s68 = sshll.u32 %s4, 4
      %s69 = int_to_ptr.hbm [resolvable:$true] %s68
      %s70 = sshll.u32 [#allocation10], 4
      %s71 = int_to_ptr.vmem [resolvable:$true] %s70
      %76 = dma.hbm_to_vmem [thread:$0]  %s69, 256, %s71, [#allocation9], 128, 128, 8
    $region21: #{model_forward.1} parent=1 // pred_fallthru
      _
    // Predicated region
    $region22: #{model_forward.1} parent=1 // pred_check
      _
    $region23: #{model_forward.1} parent=1 // pred_check_branch
      %78 = sbr.rel (0) target = $region25
    $region24: #{model_forward.1} parent=1 // pred_region
      _
    $region25: #{model_forward.1} parent=1 // pred_fallthru
      _
    // Predicated region
    $region26: #{model_forward.1} parent=1 // pred_check
      _
    $region27: #{model_forward.1} parent=1 // pred_check_branch
      %80 = sbr.rel (0) target = $region29
    $region28: #{model_forward.1} parent=1 // pred_region
      _
    $region29: #{model_forward.1} parent=1 // pred_fallthru
      _
    // Predicated region
    $region30: #{model_forward.1} parent=1 // pred_check
      _
    $region31: #{model_forward.1} parent=1 // pred_check_branch
      %82 = sbr.rel (0) target = $region33
    $region32: #{model_forward.1} parent=1 // pred_region
      %84 = dma.done [#allocation3], 128
    $region33: #{model_forward.1} parent=1 // pred_fallthru
      _
    // Predicated region
    $region34: #{model_forward.1} parent=1 // pred_check
      _
    $region35: #{model_forward.1} parent=1 // pred_check_branch
      %86 = sbr.rel (0) target = $region37
    $region36: #{model_forward.1} parent=1 // pred_region
      %88 = dma.done [#allocation6], 4096
    $region37: #{model_forward.1} parent=1 // pred_fallthru
      _
    // Predicated region
    $region38: #{model_forward.1} parent=1 // pred_check
      _
    $region39: #{model_forward.1} parent=1 // pred_check_branch
      %90 = sbr.rel (0) target = $region41
    $region40: #{model_forward.1} parent=1 // pred_region
      %92 = dma.done [#allocation6], 256
    $region41: #{model_forward.1} parent=1 // pred_fallthru
      _
    // Predicated region
    $region42: #{model_forward.1} parent=1 // pred_check
      _
    $region43: #{model_forward.1} parent=1 // pred_check_branch
      %94 = sbr.rel (0) target = $region45
    $region44: #{model_forward.1} parent=1 // pred_region
      %96 = dma.done [#allocation9], 32768
    $region45: #{model_forward.1} parent=1 // pred_fallthru
      _
    // Predicated region
    $region46: #{model_forward.1} parent=1 // pred_check
      _
    $region47: #{model_forward.1} parent=1 // pred_check_branch
      %98 = sbr.rel (0) target = $region49
    $region48: #{model_forward.1} parent=1 // pred_region
      %100 = dma.done [#allocation9], 256
    $region49: #{model_forward.1} parent=1 // pred_fallthru
      _
    %v101 = vld [vmem:[#allocation2] sm:$0xff]
    %vm102 = vcmask 130048
    %v103 = vsel %vm102, %v101, 0.0
    %104 = vadd.xlane.f32.xlu0 %v103
    %v105 = vpop.xlane.xlu0 %104
    %v106 = vrcp.pop 16.0
    %v107 = vmul.f32 16.0, %v106
    %v108 = vsub.f32 1.0, %v107
    %v109 = vmul.f32 %v106, %v108
    %v110 = vadd.f32 %v106, %v109
    %vm111 = vweird.f32 %v106
    %v112 = vsel %vm111, %v106, %v110
    %v113 = vmul.f32 %v105, %v112
    %v114 = vsub.f32 %v101, %v113
    %v115 = vmul.f32 %v114, %v114
    %v116 = vsel %vm102, %v115, 0.0
    %117 = vadd.xlane.f32.xlu0 %v116
    %v118 = vpop.xlane.xlu0 %117
    %v119 = vmul.f32 %v118, %v112
    %v120 = vadd.f32 %v119, 1e-05
    %v121 = vrsqrt.pop %v120
    %v122 = vmul.f32 %v121, %v120
    %v123 = vmul.f32 %v122, %v121
    %v124 = vmul.f32 0.5, %v123
    %v125 = vsub.f32 1.5, %v124
    %v126 = vmul.f32 %v121, %v125
    %v127 = vmul.f32 %v120, %v126
    %vm128 = vcmp.eq.f32.partialorder %v120, inf
    %v129 = vsel %vm128, %v120, %v127
    %vm130 = vcmp.eq.f32.partialorder %v120, 0.0
    %v131 = vand.u32 %v120, 2147483648
    %v132 = vsel %vm130, %v131, %v129
    %v133 = vrcp.pop %v132
    %v134 = vmul.f32 %v132, %v133
    %v135 = vsub.f32 1.0, %v134
    %v136 = vmul.f32 %v133, %v135
    %v137 = vadd.f32 %v133, %v136
    %vm138 = vweird.f32 %v132
    %vm139 = vweird.f32 %v133
    %vm140 = vmor %vm138, %vm139
    %v141 = vsel %vm140, %v133, %v137
    %v142 = vand.u32 2147483647, %v132
    %vm143 = vcmp.eq.f32.partialorder %v142, 8.507059e+37
    %v144 = vand.u32 %v132, 2147483648
    %v145 = vor.u32 1.1754944e-38, %v144
    %v146 = vsel %vm143, %v145, %v141
    %v147 = vmul.f32 %v114, %v146
    %v148 = vld [vmem:[#allocation5] sm:$0xff]
    %v149 = vld [vmem:[#allocation5 + $0x8] sm:$0xff]
    %v150 = vld [vmem:[#allocation5 + $0x10] sm:$0xff]
    %v151 = vld [vmem:[#allocation5 + $0x18] sm:$0xff]
    %v152 = vld [vmem:[#allocation5 + $0x20] sm:$0xff]
    %v153 = vld [vmem:[#allocation5 + $0x28] sm:$0xff]
    %v154 = vld [vmem:[#allocation5 + $0x30] sm:$0xff]
    %v155 = vld [vmem:[#allocation5 + $0x38] sm:$0xff]
    %v156 = vld [vmem:[#allocation5 + $0x40] sm:$0xff]
    %v157 = vld [vmem:[#allocation5 + $0x48] sm:$0xff]
    %v158 = vld [vmem:[#allocation5 + $0x50] sm:$0xff]
    %v159 = vld [vmem:[#allocation5 + $0x58] sm:$0xff]
    %v160 = vld [vmem:[#allocation5 + $0x60] sm:$0xff]
    %v161 = vld [vmem:[#allocation5 + $0x68] sm:$0xff]
    %v162 = vld [vmem:[#allocation5 + $0x70] sm:$0xff]
    %v163 = vld [vmem:[#allocation5 + $0x78] sm:$0xff]
    %v164 = vld [vmem:[#allocation5 + $0x80] sm:$0xff]
    %v165 = vld [vmem:[#allocation5 + $0x88] sm:$0xff]
    %v166 = vld [vmem:[#allocation5 + $0x90] sm:$0xff]
    %v167 = vld [vmem:[#allocation5 + $0x98] sm:$0xff]
    %v168 = vld [vmem:[#allocation5 + $0xa0] sm:$0xff]
    %v169 = vld [vmem:[#allocation5 + $0xa8] sm:$0xff]
    %v170 = vld [vmem:[#allocation5 + $0xb0] sm:$0xff]
    %v171 = vld [vmem:[#allocation5 + $0xb8] sm:$0xff]
    %v172 = vld [vmem:[#allocation5 + $0xc0] sm:$0xff]
    %v173 = vld [vmem:[#allocation5 + $0xc8] sm:$0xff]
    %v174 = vld [vmem:[#allocation5 + $0xd0] sm:$0xff]
    %v175 = vld [vmem:[#allocation5 + $0xd8] sm:$0xff]
    %v176 = vld [vmem:[#allocation5 + $0xe0] sm:$0xff]
    %v177 = vld [vmem:[#allocation5 + $0xe8] sm:$0xff]
    %v178 = vld [vmem:[#allocation5 + $0xf0] sm:$0xff]
    %v179 = vld [vmem:[#allocation5 + $0xf8] sm:$0xff]
    %v180 = vld [vmem:[#allocation7] sm:$0xff]
    %v181 = vld [vmem:[#allocation7 + $0x8] sm:$0xff]
    %v184 = vperm.slane %v180, 0
    %v185 = vperm.slane %v180, 1
    %v186 = vperm.slane %v180, 2
    %v187 = vperm.slane %v180, 3
    %v188 = vperm.slane %v180, 4
    %v189 = vperm.slane %v180, 5
    %v190 = vperm.slane %v180, 6
    %v191 = vperm.slane %v180, 7
    %v192 = vperm.slane %v181, 0
    %v193 = vperm.slane %v181, 1
    %v194 = vperm.slane %v181, 2
    %v195 = vperm.slane %v181, 3
    %v196 = vperm.slane %v181, 4
    %v197 = vperm.slane %v181, 5
    %v198 = vperm.slane %v181, 6
    %v199 = vperm.slane %v181, 7
    %v217 = vsel %vm102, %v147, 0
    %219 = vmatpush.msra.mxu0 0.0
    %220 = vmatpush.msra.mxu0 0.0
    %221 = vmatpush.msra.mxu0 0.0
    %222 = vmatpush.msra.mxu0 0.0
    %223 = vmatpush.msra.mxu0 0.0
    %224 = vmatpush.msra.mxu0 0.0
    %225 = vmatpush.msra.mxu0 0.0
    %226 = vmatpush.msra.mxu0 0.0
    %227 = vmatpush.msra.mxu0 0.0
    %228 = vmatpush.msra.mxu0 0.0
    %229 = vmatpush.msra.mxu0 0.0
    %230 = vmatpush.msra.mxu0 0.0
    %231 = vmatpush.msra.mxu0 0.0
    %232 = vmatpush.msra.mxu0 0.0
    %233 = vmatpush.msra.mxu0 %v164
    %234 = vmatpush.msra.mxu0 %v148
    %235 = vmatmul.f32.gmra.mxu0 %v217
    %v236 = vpop.f32.mrf.mxu0
    %v237 = vadd.f32 %v184, %v236
    %238 = vdwg.mxu0
    %239 = vmatpush.msra.mxu0 0.0
    %240 = vmatpush.msra.mxu0 0.0
    %241 = vmatpush.msra.mxu0 0.0
    %242 = vmatpush.msra.mxu0 0.0
    %243 = vmatpush.msra.mxu0 0.0
    %244 = vmatpush.msra.mxu0 0.0
    %245 = vmatpush.msra.mxu0 0.0
    %246 = vmatpush.msra.mxu0 0.0
    %247 = vmatpush.msra.mxu0 0.0
    %248 = vmatpush.msra.mxu0 0.0
    %249 = vmatpush.msra.mxu0 0.0
    %250 = vmatpush.msra.mxu0 0.0
    %251 = vmatpush.msra.mxu0 0.0
    %252 = vmatpush.msra.mxu0 0.0
    %253 = vmatpush.msra.mxu0 %v165
    %254 = vmatpush.msra.mxu0 %v149
    %255 = vmatmul.f32.gmra.mxu0 %v217
    %v256 = vpop.f32.mrf.mxu0
    %v257 = vadd.f32 %v185, %v256
    %258 = vdwg.mxu0
    %259 = vmatpush.msra.mxu0 0.0
    %260 = vmatpush.msra.mxu0 0.0
    %261 = vmatpush.msra.mxu0 0.0
    %262 = vmatpush.msra.mxu0 0.0
    %263 = vmatpush.msra.mxu0 0.0
    %264 = vmatpush.msra.mxu0 0.0
    %265 = vmatpush.msra.mxu0 0.0
    %266 = vmatpush.msra.mxu0 0.0
    %267 = vmatpush.msra.mxu0 0.0
    %268 = vmatpush.msra.mxu0 0.0
    %269 = vmatpush.msra.mxu0 0.0
    %270 = vmatpush.msra.mxu0 0.0
    %271 = vmatpush.msra.mxu0 0.0
    %272 = vmatpush.msra.mxu0 0.0
    %273 = vmatpush.msra.mxu0 %v166
    %274 = vmatpush.msra.mxu0 %v150
    %275 = vmatmul.f32.gmra.mxu0 %v217
    %v276 = vpop.f32.mrf.mxu0
    %v277 = vadd.f32 %v186, %v276
    %278 = vdwg.mxu0
    %279 = vmatpush.msra.mxu0 0.0
    %280 = vmatpush.msra.mxu0 0.0
    %281 = vmatpush.msra.mxu0 0.0
    %282 = vmatpush.msra.mxu0 0.0
    %283 = vmatpush.msra.mxu0 0.0
    %284 = vmatpush.msra.mxu0 0.0
    %285 = vmatpush.msra.mxu0 0.0
    %286 = vmatpush.msra.mxu0 0.0
    %287 = vmatpush.msra.mxu0 0.0
    %288 = vmatpush.msra.mxu0 0.0
    %289 = vmatpush.msra.mxu0 0.0
    %290 = vmatpush.msra.mxu0 0.0
    %291 = vmatpush.msra.mxu0 0.0
    %292 = vmatpush.msra.mxu0 0.0
    %293 = vmatpush.msra.mxu0 %v167
    %294 = vmatpush.msra.mxu0 %v151
    %295 = vmatmul.f32.gmra.mxu0 %v217
    %v296 = vpop.f32.mrf.mxu0
    %v297 = vadd.f32 %v187, %v296
    %298 = vdwg.mxu0
    %299 = vmatpush.msra.mxu0 0.0
    %300 = vmatpush.msra.mxu0 0.0
    %301 = vmatpush.msra.mxu0 0.0
    %302 = vmatpush.msra.mxu0 0.0
    %303 = vmatpush.msra.mxu0 0.0
    %304 = vmatpush.msra.mxu0 0.0
    %305 = vmatpush.msra.mxu0 0.0
    %306 = vmatpush.msra.mxu0 0.0
    %307 = vmatpush.msra.mxu0 0.0
    %308 = vmatpush.msra.mxu0 0.0
    %309 = vmatpush.msra.mxu0 0.0
    %310 = vmatpush.msra.mxu0 0.0
    %311 = vmatpush.msra.mxu0 0.0
    %312 = vmatpush.msra.mxu0 0.0
    %313 = vmatpush.msra.mxu0 %v168
    %314 = vmatpush.msra.mxu0 %v152
    %315 = vmatmul.f32.gmra.mxu0 %v217
    %v316 = vpop.f32.mrf.mxu0
    %v317 = vadd.f32 %v188, %v316
    %318 = vdwg.mxu0
    %319 = vmatpush.msra.mxu0 0.0
    %320 = vmatpush.msra.mxu0 0.0
    %321 = vmatpush.msra.mxu0 0.0
    %322 = vmatpush.msra.mxu0 0.0
    %323 = vmatpush.msra.mxu0 0.0
    %324 = vmatpush.msra.mxu0 0.0
    %325 = vmatpush.msra.mxu0 0.0
    %326 = vmatpush.msra.mxu0 0.0
    %327 = vmatpush.msra.mxu0 0.0
    %328 = vmatpush.msra.mxu0 0.0
    %329 = vmatpush.msra.mxu0 0.0
    %330 = vmatpush.msra.mxu0 0.0
    %331 = vmatpush.msra.mxu0 0.0
    %332 = vmatpush.msra.mxu0 0.0
    %333 = vmatpush.msra.mxu0 %v169
    %334 = vmatpush.msra.mxu0 %v153
    %335 = vmatmul.f32.gmra.mxu0 %v217
    %v336 = vpop.f32.mrf.mxu0
    %v337 = vadd.f32 %v189, %v336
    %338 = vdwg.mxu0
    %339 = vmatpush.msra.mxu0 0.0
    %340 = vmatpush.msra.mxu0 0.0
    %341 = vmatpush.msra.mxu0 0.0
    %342 = vmatpush.msra.mxu0 0.0
    %343 = vmatpush.msra.mxu0 0.0
    %344 = vmatpush.msra.mxu0 0.0
    %345 = vmatpush.msra.mxu0 0.0
    %346 = vmatpush.msra.mxu0 0.0
    %347 = vmatpush.msra.mxu0 0.0
    %348 = vmatpush.msra.mxu0 0.0
    %349 = vmatpush.msra.mxu0 0.0
    %350 = vmatpush.msra.mxu0 0.0
    %351 = vmatpush.msra.mxu0 0.0
    %352 = vmatpush.msra.mxu0 0.0
    %353 = vmatpush.msra.mxu0 %v170
    %354 = vmatpush.msra.mxu0 %v154
    %355 = vmatmul.f32.gmra.mxu0 %v217
    %v356 = vpop.f32.mrf.mxu0
    %v357 = vadd.f32 %v190, %v356
    %358 = vdwg.mxu0
    %359 = vmatpush.msra.mxu0 0.0
    %360 = vmatpush.msra.mxu0 0.0
    %361 = vmatpush.msra.mxu0 0.0
    %362 = vmatpush.msra.mxu0 0.0
    %363 = vmatpush.msra.mxu0 0.0
    %364 = vmatpush.msra.mxu0 0.0
    %365 = vmatpush.msra.mxu0 0.0
    %366 = vmatpush.msra.mxu0 0.0
    %367 = vmatpush.msra.mxu0 0.0
    %368 = vmatpush.msra.mxu0 0.0
    %369 = vmatpush.msra.mxu0 0.0
    %370 = vmatpush.msra.mxu0 0.0
    %371 = vmatpush.msra.mxu0 0.0
    %372 = vmatpush.msra.mxu0 0.0
    %373 = vmatpush.msra.mxu0 %v171
    %374 = vmatpush.msra.mxu0 %v155
    %375 = vmatmul.f32.gmra.mxu0 %v217
    %v376 = vpop.f32.mrf.mxu0
    %v377 = vadd.f32 %v191, %v376
    %378 = vdwg.mxu0
    %379 = vmatpush.msra.mxu0 0.0
    %380 = vmatpush.msra.mxu0 0.0
    %381 = vmatpush.msra.mxu0 0.0
    %382 = vmatpush.msra.mxu0 0.0
    %383 = vmatpush.msra.mxu0 0.0
    %384 = vmatpush.msra.mxu0 0.0
    %385 = vmatpush.msra.mxu0 0.0
    %386 = vmatpush.msra.mxu0 0.0
    %387 = vmatpush.msra.mxu0 0.0
    %388 = vmatpush.msra.mxu0 0.0
    %389 = vmatpush.msra.mxu0 0.0
    %390 = vmatpush.msra.mxu0 0.0
    %391 = vmatpush.msra.mxu0 0.0
    %392 = vmatpush.msra.mxu0 0.0
    %393 = vmatpush.msra.mxu0 %v172
    %394 = vmatpush.msra.mxu0 %v156
    %395 = vmatmul.f32.gmra.mxu0 %v217
    %v396 = vpop.f32.mrf.mxu0
    %v397 = vadd.f32 %v192, %v396
    %398 = vdwg.mxu0
    %399 = vmatpush.msra.mxu0 0.0
    %400 = vmatpush.msra.mxu0 0.0
    %401 = vmatpush.msra.mxu0 0.0
    %402 = vmatpush.msra.mxu0 0.0
    %403 = vmatpush.msra.mxu0 0.0
    %404 = vmatpush.msra.mxu0 0.0
    %405 = vmatpush.msra.mxu0 0.0
    %406 = vmatpush.msra.mxu0 0.0
    %407 = vmatpush.msra.mxu0 0.0
    %408 = vmatpush.msra.mxu0 0.0
    %409 = vmatpush.msra.mxu0 0.0
    %410 = vmatpush.msra.mxu0 0.0
    %411 = vmatpush.msra.mxu0 0.0
    %412 = vmatpush.msra.mxu0 0.0
    %413 = vmatpush.msra.mxu0 %v173
    %414 = vmatpush.msra.mxu0 %v157
    %415 = vmatmul.f32.gmra.mxu0 %v217
    %v416 = vpop.f32.mrf.mxu0
    %v417 = vadd.f32 %v193, %v416
    %418 = vdwg.mxu0
    %419 = vmatpush.msra.mxu0 0.0
    %420 = vmatpush.msra.mxu0 0.0
    %421 = vmatpush.msra.mxu0 0.0
    %422 = vmatpush.msra.mxu0 0.0
    %423 = vmatpush.msra.mxu0 0.0
    %424 = vmatpush.msra.mxu0 0.0
    %425 = vmatpush.msra.mxu0 0.0
    %426 = vmatpush.msra.mxu0 0.0
    %427 = vmatpush.msra.mxu0 0.0
    %428 = vmatpush.msra.mxu0 0.0
    %429 = vmatpush.msra.mxu0 0.0
    %430 = vmatpush.msra.mxu0 0.0
    %431 = vmatpush.msra.mxu0 0.0
    %432 = vmatpush.msra.mxu0 0.0
    %433 = vmatpush.msra.mxu0 %v174
    %434 = vmatpush.msra.mxu0 %v158
    %435 = vmatmul.f32.gmra.mxu0 %v217
    %v436 = vpop.f32.mrf.mxu0
    %v437 = vadd.f32 %v194, %v436
    %438 = vdwg.mxu0
    %439 = vmatpush.msra.mxu0 0.0
    %440 = vmatpush.msra.mxu0 0.0
    %441 = vmatpush.msra.mxu0 0.0
    %442 = vmatpush.msra.mxu0 0.0
    %443 = vmatpush.msra.mxu0 0.0
    %444 = vmatpush.msra.mxu0 0.0
    %445 = vmatpush.msra.mxu0 0.0
    %446 = vmatpush.msra.mxu0 0.0
    %447 = vmatpush.msra.mxu0 0.0
    %448 = vmatpush.msra.mxu0 0.0
    %449 = vmatpush.msra.mxu0 0.0
    %450 = vmatpush.msra.mxu0 0.0
    %451 = vmatpush.msra.mxu0 0.0
    %452 = vmatpush.msra.mxu0 0.0
    %453 = vmatpush.msra.mxu0 %v175
    %454 = vmatpush.msra.mxu0 %v159
    %455 = vmatmul.f32.gmra.mxu0 %v217
    %v456 = vpop.f32.mrf.mxu0
    %v457 = vadd.f32 %v195, %v456
    %458 = vdwg.mxu0
    %459 = vmatpush.msra.mxu0 0.0
    %460 = vmatpush.msra.mxu0 0.0
    %461 = vmatpush.msra.mxu0 0.0
    %462 = vmatpush.msra.mxu0 0.0
    %463 = vmatpush.msra.mxu0 0.0
    %464 = vmatpush.msra.mxu0 0.0
    %465 = vmatpush.msra.mxu0 0.0
    %466 = vmatpush.msra.mxu0 0.0
    %467 = vmatpush.msra.mxu0 0.0
    %468 = vmatpush.msra.mxu0 0.0
    %469 = vmatpush.msra.mxu0 0.0
    %470 = vmatpush.msra.mxu0 0.0
    %471 = vmatpush.msra.mxu0 0.0
    %472 = vmatpush.msra.mxu0 0.0
    %473 = vmatpush.msra.mxu0 %v176
    %474 = vmatpush.msra.mxu0 %v160
    %475 = vmatmul.f32.gmra.mxu0 %v217
    %v476 = vpop.f32.mrf.mxu0
    %v477 = vadd.f32 %v196, %v476
    %478 = vdwg.mxu0
    %479 = vmatpush.msra.mxu0 0.0
    %480 = vmatpush.msra.mxu0 0.0
    %481 = vmatpush.msra.mxu0 0.0
    %482 = vmatpush.msra.mxu0 0.0
    %483 = vmatpush.msra.mxu0 0.0
    %484 = vmatpush.msra.mxu0 0.0
    %485 = vmatpush.msra.mxu0 0.0
    %486 = vmatpush.msra.mxu0 0.0
    %487 = vmatpush.msra.mxu0 0.0
    %488 = vmatpush.msra.mxu0 0.0
    %489 = vmatpush.msra.mxu0 0.0
    %490 = vmatpush.msra.mxu0 0.0
    %491 = vmatpush.msra.mxu0 0.0
    %492 = vmatpush.msra.mxu0 0.0
    %493 = vmatpush.msra.mxu0 %v177
    %494 = vmatpush.msra.mxu0 %v161
    %495 = vmatmul.f32.gmra.mxu0 %v217
    %v496 = vpop.f32.mrf.mxu0
    %v497 = vadd.f32 %v197, %v496
    %498 = vdwg.mxu0
    %499 = vmatpush.msra.mxu0 0.0
    %500 = vmatpush.msra.mxu0 0.0
    %501 = vmatpush.msra.mxu0 0.0
    %502 = vmatpush.msra.mxu0 0.0
    %503 = vmatpush.msra.mxu0 0.0
    %504 = vmatpush.msra.mxu0 0.0
    %505 = vmatpush.msra.mxu0 0.0
    %506 = vmatpush.msra.mxu0 0.0
    %507 = vmatpush.msra.mxu0 0.0
    %508 = vmatpush.msra.mxu0 0.0
    %509 = vmatpush.msra.mxu0 0.0
    %510 = vmatpush.msra.mxu0 0.0
    %511 = vmatpush.msra.mxu0 0.0
    %512 = vmatpush.msra.mxu0 0.0
    %513 = vmatpush.msra.mxu0 %v178
    %514 = vmatpush.msra.mxu0 %v162
    %515 = vmatmul.f32.gmra.mxu0 %v217
    %v516 = vpop.f32.mrf.mxu0
    %v517 = vadd.f32 %v198, %v516
    %518 = vdwg.mxu0
    %519 = vmatpush.msra.mxu0 0.0
    %520 = vmatpush.msra.mxu0 0.0
    %521 = vmatpush.msra.mxu0 0.0
    %522 = vmatpush.msra.mxu0 0.0
    %523 = vmatpush.msra.mxu0 0.0
    %524 = vmatpush.msra.mxu0 0.0
    %525 = vmatpush.msra.mxu0 0.0
    %526 = vmatpush.msra.mxu0 0.0
    %527 = vmatpush.msra.mxu0 0.0
    %528 = vmatpush.msra.mxu0 0.0
    %529 = vmatpush.msra.mxu0 0.0
    %530 = vmatpush.msra.mxu0 0.0
    %531 = vmatpush.msra.mxu0 0.0
    %532 = vmatpush.msra.mxu0 0.0
    %533 = vmatpush.msra.mxu0 %v179
    %534 = vmatpush.msra.mxu0 %v163
    %535 = vmatmul.f32.gmra.mxu0 %v217
    %v536 = vpop.f32.mrf.mxu0
    %v537 = vadd.f32 %v199, %v536
    %538 = vdwg.mxu0
    %v539 = vmax.f32 %v237, 0.0
    %v540 = vmax.f32 %v257, 0.0
    %v541 = vmax.f32 %v277, 0.0
    %v542 = vmax.f32 %v297, 0.0
    %v543 = vmax.f32 %v317, 0.0
    %v544 = vmax.f32 %v337, 0.0
    %v545 = vmax.f32 %v357, 0.0
    %v546 = vmax.f32 %v377, 0.0
    %v547 = vmax.f32 %v397, 0.0
    %v548 = vmax.f32 %v417, 0.0
    %v549 = vmax.f32 %v437, 0.0
    %v550 = vmax.f32 %v457, 0.0
    %v551 = vmax.f32 %v477, 0.0
    %v552 = vmax.f32 %v497, 0.0
    %v553 = vmax.f32 %v517, 0.0
    %v554 = vmax.f32 %v537, 0.0
    %v555 = vld [vmem:[#allocation8] sm:$0xff]
    %v556 = vld [vmem:[#allocation8 + $0x8] sm:$0xff]
    %v557 = vld [vmem:[#allocation8 + $0x10] sm:$0xff]
    %v558 = vld [vmem:[#allocation8 + $0x18] sm:$0xff]
    %v559 = vld [vmem:[#allocation8 + $0x20] sm:$0xff]
    %v560 = vld [vmem:[#allocation8 + $0x28] sm:$0xff]
    %v561 = vld [vmem:[#allocation8 + $0x30] sm:$0xff]
    %v562 = vld [vmem:[#allocation8 + $0x38] sm:$0xff]
    %v563 = vld [vmem:[#allocation8 + $0x40] sm:$0xff]
    %v564 = vld [vmem:[#allocation8 + $0x48] sm:$0xff]
    %v565 = vld [vmem:[#allocation8 + $0x50] sm:$0xff]
    %v566 = vld [vmem:[#allocation8 + $0x58] sm:$0xff]
    %v567 = vld [vmem:[#allocation8 + $0x60] sm:$0xff]
    %v568 = vld [vmem:[#allocation8 + $0x68] sm:$0xff]
    %v569 = vld [vmem:[#allocation8 + $0x70] sm:$0xff]
    %v570 = vld [vmem:[#allocation8 + $0x78] sm:$0xff]
    %v571 = vld [vmem:[#allocation8 + $0x80] sm:$0xff]
    %v572 = vld [vmem:[#allocation8 + $0x88] sm:$0xff]
    %v573 = vld [vmem:[#allocation8 + $0x90] sm:$0xff]
    %v574 = vld [vmem:[#allocation8 + $0x98] sm:$0xff]
    %v575 = vld [vmem:[#allocation8 + $0xa0] sm:$0xff]
    %v576 = vld [vmem:[#allocation8 + $0xa8] sm:$0xff]
    %v577 = vld [vmem:[#allocation8 + $0xb0] sm:$0xff]
    %v578 = vld [vmem:[#allocation8 + $0xb8] sm:$0xff]
    %v579 = vld [vmem:[#allocation8 + $0xc0] sm:$0xff]
    %v580 = vld [vmem:[#allocation8 + $0xc8] sm:$0xff]
    %v581 = vld [vmem:[#allocation8 + $0xd0] sm:$0xff]
    %v582 = vld [vmem:[#allocation8 + $0xd8] sm:$0xff]
    %v583 = vld [vmem:[#allocation8 + $0xe0] sm:$0xff]
    %v584 = vld [vmem:[#allocation8 + $0xe8] sm:$0xff]
    %v585 = vld [vmem:[#allocation8 + $0xf0] sm:$0xff]
    %v586 = vld [vmem:[#allocation8 + $0xf8] sm:$0xff]
    %v587 = vld [vmem:[#allocation8 + $0x100] sm:$0xff]
    %v588 = vld [vmem:[#allocation8 + $0x108] sm:$0xff]
    %v589 = vld [vmem:[#allocation8 + $0x110] sm:$0xff]
    %v590 = vld [vmem:[#allocation8 + $0x118] sm:$0xff]
    %v591 = vld [vmem:[#allocation8 + $0x120] sm:$0xff]
    %v592 = vld [vmem:[#allocation8 + $0x128] sm:$0xff]
    %v593 = vld [vmem:[#allocation8 + $0x130] sm:$0xff]
    %v594 = vld [vmem:[#allocation8 + $0x138] sm:$0xff]
    %v595 = vld [vmem:[#allocation8 + $0x140] sm:$0xff]
    %v596 = vld [vmem:[#allocation8 + $0x148] sm:$0xff]
    %v597 = vld [vmem:[#allocation8 + $0x150] sm:$0xff]
    %v598 = vld [vmem:[#allocation8 + $0x158] sm:$0xff]
    %v599 = vld [vmem:[#allocation8 + $0x160] sm:$0xff]
    %v600 = vld [vmem:[#allocation8 + $0x168] sm:$0xff]
    %v601 = vld [vmem:[#allocation8 + $0x170] sm:$0xff]
    %v602 = vld [vmem:[#allocation8 + $0x178] sm:$0xff]
    %v603 = vld [vmem:[#allocation8 + $0x180] sm:$0xff]
    %v604 = vld [vmem:[#allocation8 + $0x188] sm:$0xff]
    %v605 = vld [vmem:[#allocation8 + $0x190] sm:$0xff]
    %v606 = vld [vmem:[#allocation8 + $0x198] sm:$0xff]
    %v607 = vld [vmem:[#allocation8 + $0x1a0] sm:$0xff]
    %v608 = vld [vmem:[#allocation8 + $0x1a8] sm:$0xff]
    %v609 = vld [vmem:[#allocation8 + $0x1b0] sm:$0xff]
    %v610 = vld [vmem:[#allocation8 + $0x1b8] sm:$0xff]
    %v611 = vld [vmem:[#allocation8 + $0x1c0] sm:$0xff]
    %v612 = vld [vmem:[#allocation8 + $0x1c8] sm:$0xff]
    %v613 = vld [vmem:[#allocation8 + $0x1d0] sm:$0xff]
    %v614 = vld [vmem:[#allocation8 + $0x1d8] sm:$0xff]
    %v615 = vld [vmem:[#allocation8 + $0x1e0] sm:$0xff]
    %v616 = vld [vmem:[#allocation8 + $0x1e8] sm:$0xff]
    %v617 = vld [vmem:[#allocation8 + $0x1f0] sm:$0xff]
    %v618 = vld [vmem:[#allocation8 + $0x1f8] sm:$0xff]
    %v619 = vld [vmem:[#allocation8 + $0x200] sm:$0xff]
    %v620 = vld [vmem:[#allocation8 + $0x208] sm:$0xff]
    %v621 = vld [vmem:[#allocation8 + $0x210] sm:$0xff]
    %v622 = vld [vmem:[#allocation8 + $0x218] sm:$0xff]
    %v623 = vld [vmem:[#allocation8 + $0x220] sm:$0xff]
    %v624 = vld [vmem:[#allocation8 + $0x228] sm:$0xff]
    %v625 = vld [vmem:[#allocation8 + $0x230] sm:$0xff]
    %v626 = vld [vmem:[#allocation8 + $0x238] sm:$0xff]
    %v627 = vld [vmem:[#allocation8 + $0x240] sm:$0xff]
    %v628 = vld [vmem:[#allocation8 + $0x248] sm:$0xff]
    %v629 = vld [vmem:[#allocation8 + $0x250] sm:$0xff]
    %v630 = vld [vmem:[#allocation8 + $0x258] sm:$0xff]
    %v631 = vld [vmem:[#allocation8 + $0x260] sm:$0xff]
    %v632 = vld [vmem:[#allocation8 + $0x268] sm:$0xff]
    %v633 = vld [vmem:[#allocation8 + $0x270] sm:$0xff]
    %v634 = vld [vmem:[#allocation8 + $0x278] sm:$0xff]
    %v635 = vld [vmem:[#allocation8 + $0x280] sm:$0xff]
    %v636 = vld [vmem:[#allocation8 + $0x288] sm:$0xff]
    %v637 = vld [vmem:[#allocation8 + $0x290] sm:$0xff]
    %v638 = vld [vmem:[#allocation8 + $0x298] sm:$0xff]
    %v639 = vld [vmem:[#allocation8 + $0x2a0] sm:$0xff]
    %v640 = vld [vmem:[#allocation8 + $0x2a8] sm:$0xff]
    %v641 = vld [vmem:[#allocation8 + $0x2b0] sm:$0xff]
    %v642 = vld [vmem:[#allocation8 + $0x2b8] sm:$0xff]
    %v643 = vld [vmem:[#allocation8 + $0x2c0] sm:$0xff]
    %v644 = vld [vmem:[#allocation8 + $0x2c8] sm:$0xff]
    %v645 = vld [vmem:[#allocation8 + $0x2d0] sm:$0xff]
    %v646 = vld [vmem:[#allocation8 + $0x2d8] sm:$0xff]
    %v647 = vld [vmem:[#allocation8 + $0x2e0] sm:$0xff]
    %v648 = vld [vmem:[#allocation8 + $0x2e8] sm:$0xff]
    %v649 = vld [vmem:[#allocation8 + $0x2f0] sm:$0xff]
    %v650 = vld [vmem:[#allocation8 + $0x2f8] sm:$0xff]
    %v651 = vld [vmem:[#allocation8 + $0x300] sm:$0xff]
    %v652 = vld [vmem:[#allocation8 + $0x308] sm:$0xff]
    %v653 = vld [vmem:[#allocation8 + $0x310] sm:$0xff]
    %v654 = vld [vmem:[#allocation8 + $0x318] sm:$0xff]
    %v655 = vld [vmem:[#allocation8 + $0x320] sm:$0xff]
    %v656 = vld [vmem:[#allocation8 + $0x328] sm:$0xff]
    %v657 = vld [vmem:[#allocation8 + $0x330] sm:$0xff]
    %v658 = vld [vmem:[#allocation8 + $0x338] sm:$0xff]
    %v659 = vld [vmem:[#allocation8 + $0x340] sm:$0xff]
    %v660 = vld [vmem:[#allocation8 + $0x348] sm:$0xff]
    %v661 = vld [vmem:[#allocation8 + $0x350] sm:$0xff]
    %v662 = vld [vmem:[#allocation8 + $0x358] sm:$0xff]
    %v663 = vld [vmem:[#allocation8 + $0x360] sm:$0xff]
    %v664 = vld [vmem:[#allocation8 + $0x368] sm:$0xff]
    %v665 = vld [vmem:[#allocation8 + $0x370] sm:$0xff]
    %v666 = vld [vmem:[#allocation8 + $0x378] sm:$0xff]
    %v667 = vld [vmem:[#allocation8 + $0x380] sm:$0xff]
    %v668 = vld [vmem:[#allocation8 + $0x388] sm:$0xff]
    %v669 = vld [vmem:[#allocation8 + $0x390] sm:$0xff]
    %v670 = vld [vmem:[#allocation8 + $0x398] sm:$0xff]
    %v671 = vld [vmem:[#allocation8 + $0x3a0] sm:$0xff]
    %v672 = vld [vmem:[#allocation8 + $0x3a8] sm:$0xff]
    %v673 = vld [vmem:[#allocation8 + $0x3b0] sm:$0xff]
    %v674 = vld [vmem:[#allocation8 + $0x3b8] sm:$0xff]
    %v675 = vld [vmem:[#allocation8 + $0x3c0] sm:$0xff]
    %v676 = vld [vmem:[#allocation8 + $0x3c8] sm:$0xff]
    %v677 = vld [vmem:[#allocation8 + $0x3d0] sm:$0xff]
    %v678 = vld [vmem:[#allocation8 + $0x3d8] sm:$0xff]
    %v679 = vld [vmem:[#allocation8 + $0x3e0] sm:$0xff]
    %v680 = vld [vmem:[#allocation8 + $0x3e8] sm:$0xff]
    %v681 = vld [vmem:[#allocation8 + $0x3f0] sm:$0xff]
    %v682 = vld [vmem:[#allocation8 + $0x3f8] sm:$0xff]
    %v683 = vld [vmem:[#allocation8 + $0x400] sm:$0xff]
    %v684 = vld [vmem:[#allocation8 + $0x408] sm:$0xff]
    %v685 = vld [vmem:[#allocation8 + $0x410] sm:$0xff]
    %v686 = vld [vmem:[#allocation8 + $0x418] sm:$0xff]
    %v687 = vld [vmem:[#allocation8 + $0x420] sm:$0xff]
    %v688 = vld [vmem:[#allocation8 + $0x428] sm:$0xff]
    %v689 = vld [vmem:[#allocation8 + $0x430] sm:$0xff]
    %v690 = vld [vmem:[#allocation8 + $0x438] sm:$0xff]
    %v691 = vld [vmem:[#allocation8 + $0x440] sm:$0xff]
    %v692 = vld [vmem:[#allocation8 + $0x448] sm:$0xff]
    %v693 = vld [vmem:[#allocation8 + $0x450] sm:$0xff]
    %v694 = vld [vmem:[#allocation8 + $0x458] sm:$0xff]
    %v695 = vld [vmem:[#allocation8 + $0x460] sm:$0xff]
    %v696 = vld [vmem:[#allocation8 + $0x468] sm:$0xff]
    %v697 = vld [vmem:[#allocation8 + $0x470] sm:$0xff]
    %v698 = vld [vmem:[#allocation8 + $0x478] sm:$0xff]
    %v699 = vld [vmem:[#allocation8 + $0x480] sm:$0xff]
    %v700 = vld [vmem:[#allocation8 + $0x488] sm:$0xff]
    %v701 = vld [vmem:[#allocation8 + $0x490] sm:$0xff]
    %v702 = vld [vmem:[#allocation8 + $0x498] sm:$0xff]
    %v703 = vld [vmem:[#allocation8 + $0x4a0] sm:$0xff]
    %v704 = vld [vmem:[#allocation8 + $0x4a8] sm:$0xff]
    %v705 = vld [vmem:[#allocation8 + $0x4b0] sm:$0xff]
    %v706 = vld [vmem:[#allocation8 + $0x4b8] sm:$0xff]
    %v707 = vld [vmem:[#allocation8 + $0x4c0] sm:$0xff]
    %v708 = vld [vmem:[#allocation8 + $0x4c8] sm:$0xff]
    %v709 = vld [vmem:[#allocation8 + $0x4d0] sm:$0xff]
    %v710 = vld [vmem:[#allocation8 + $0x4d8] sm:$0xff]
    %v711 = vld [vmem:[#allocation8 + $0x4e0] sm:$0xff]
    %v712 = vld [vmem:[#allocation8 + $0x4e8] sm:$0xff]
    %v713 = vld [vmem:[#allocation8 + $0x4f0] sm:$0xff]
    %v714 = vld [vmem:[#allocation8 + $0x4f8] sm:$0xff]
    %v715 = vld [vmem:[#allocation8 + $0x500] sm:$0xff]
    %v716 = vld [vmem:[#allocation8 + $0x508] sm:$0xff]
    %v717 = vld [vmem:[#allocation8 + $0x510] sm:$0xff]
    %v718 = vld [vmem:[#allocation8 + $0x518] sm:$0xff]
    %v719 = vld [vmem:[#allocation8 + $0x520] sm:$0xff]
    %v720 = vld [vmem:[#allocation8 + $0x528] sm:$0xff]
    %v721 = vld [vmem:[#allocation8 + $0x530] sm:$0xff]
    %v722 = vld [vmem:[#allocation8 + $0x538] sm:$0xff]
    %v723 = vld [vmem:[#allocation8 + $0x540] sm:$0xff]
    %v724 = vld [vmem:[#allocation8 + $0x548] sm:$0xff]
    %v725 = vld [vmem:[#allocation8 + $0x550] sm:$0xff]
    %v726 = vld [vmem:[#allocation8 + $0x558] sm:$0xff]
    %v727 = vld [vmem:[#allocation8 + $0x560] sm:$0xff]
    %v728 = vld [vmem:[#allocation8 + $0x568] sm:$0xff]
    %v729 = vld [vmem:[#allocation8 + $0x570] sm:$0xff]
    %v730 = vld [vmem:[#allocation8 + $0x578] sm:$0xff]
    %v731 = vld [vmem:[#allocation8 + $0x580] sm:$0xff]
    %v732 = vld [vmem:[#allocation8 + $0x588] sm:$0xff]
    %v733 = vld [vmem:[#allocation8 + $0x590] sm:$0xff]
    %v734 = vld [vmem:[#allocation8 + $0x598] sm:$0xff]
    %v735 = vld [vmem:[#allocation8 + $0x5a0] sm:$0xff]
    %v736 = vld [vmem:[#allocation8 + $0x5a8] sm:$0xff]
    %v737 = vld [vmem:[#allocation8 + $0x5b0] sm:$0xff]
    %v738 = vld [vmem:[#allocation8 + $0x5b8] sm:$0xff]
    %v739 = vld [vmem:[#allocation8 + $0x5c0] sm:$0xff]
    %v740 = vld [vmem:[#allocation8 + $0x5c8] sm:$0xff]
    %v741 = vld [vmem:[#allocation8 + $0x5d0] sm:$0xff]
    %v742 = vld [vmem:[#allocation8 + $0x5d8] sm:$0xff]
    %v743 = vld [vmem:[#allocation8 + $0x5e0] sm:$0xff]
    %v744 = vld [vmem:[#allocation8 + $0x5e8] sm:$0xff]
    %v745 = vld [vmem:[#allocation8 + $0x5f0] sm:$0xff]
    %v746 = vld [vmem:[#allocation8 + $0x5f8] sm:$0xff]
    %v747 = vld [vmem:[#allocation8 + $0x600] sm:$0xff]
    %v748 = vld [vmem:[#allocation8 + $0x608] sm:$0xff]
    %v749 = vld [vmem:[#allocation8 + $0x610] sm:$0xff]
    %v750 = vld [vmem:[#allocation8 + $0x618] sm:$0xff]
    %v751 = vld [vmem:[#allocation8 + $0x620] sm:$0xff]
    %v752 = vld [vmem:[#allocation8 + $0x628] sm:$0xff]
    %v753 = vld [vmem:[#allocation8 + $0x630] sm:$0xff]
    %v754 = vld [vmem:[#allocation8 + $0x638] sm:$0xff]
    %v755 = vld [vmem:[#allocation8 + $0x640] sm:$0xff]
    %v756 = vld [vmem:[#allocation8 + $0x648] sm:$0xff]
    %v757 = vld [vmem:[#allocation8 + $0x650] sm:$0xff]
    %v758 = vld [vmem:[#allocation8 + $0x658] sm:$0xff]
    %v759 = vld [vmem:[#allocation8 + $0x660] sm:$0xff]
    %v760 = vld [vmem:[#allocation8 + $0x668] sm:$0xff]
    %v761 = vld [vmem:[#allocation8 + $0x670] sm:$0xff]
    %v762 = vld [vmem:[#allocation8 + $0x678] sm:$0xff]
    %v763 = vld [vmem:[#allocation8 + $0x680] sm:$0xff]
    %v764 = vld [vmem:[#allocation8 + $0x688] sm:$0xff]
    %v765 = vld [vmem:[#allocation8 + $0x690] sm:$0xff]
    %v766 = vld [vmem:[#allocation8 + $0x698] sm:$0xff]
    %v767 = vld [vmem:[#allocation8 + $0x6a0] sm:$0xff]
    %v768 = vld [vmem:[#allocation8 + $0x6a8] sm:$0xff]
    %v769 = vld [vmem:[#allocation8 + $0x6b0] sm:$0xff]
    %v770 = vld [vmem:[#allocation8 + $0x6b8] sm:$0xff]
    %v771 = vld [vmem:[#allocation8 + $0x6c0] sm:$0xff]
    %v772 = vld [vmem:[#allocation8 + $0x6c8] sm:$0xff]
    %v773 = vld [vmem:[#allocation8 + $0x6d0] sm:$0xff]
    %v774 = vld [vmem:[#allocation8 + $0x6d8] sm:$0xff]
    %v775 = vld [vmem:[#allocation8 + $0x6e0] sm:$0xff]
    %v776 = vld [vmem:[#allocation8 + $0x6e8] sm:$0xff]
    %v777 = vld [vmem:[#allocation8 + $0x6f0] sm:$0xff]
    %v778 = vld [vmem:[#allocation8 + $0x6f8] sm:$0xff]
    %v779 = vld [vmem:[#allocation8 + $0x700] sm:$0xff]
    %v780 = vld [vmem:[#allocation8 + $0x708] sm:$0xff]
    %v781 = vld [vmem:[#allocation8 + $0x710] sm:$0xff]
    %v782 = vld [vmem:[#allocation8 + $0x718] sm:$0xff]
    %v783 = vld [vmem:[#allocation8 + $0x720] sm:$0xff]
    %v784 = vld [vmem:[#allocation8 + $0x728] sm:$0xff]
    %v785 = vld [vmem:[#allocation8 + $0x730] sm:$0xff]
    %v786 = vld [vmem:[#allocation8 + $0x738] sm:$0xff]
    %v787 = vld [vmem:[#allocation8 + $0x740] sm:$0xff]
    %v788 = vld [vmem:[#allocation8 + $0x748] sm:$0xff]
    %v789 = vld [vmem:[#allocation8 + $0x750] sm:$0xff]
    %v790 = vld [vmem:[#allocation8 + $0x758] sm:$0xff]
    %v791 = vld [vmem:[#allocation8 + $0x760] sm:$0xff]
    %v792 = vld [vmem:[#allocation8 + $0x768] sm:$0xff]
    %v793 = vld [vmem:[#allocation8 + $0x770] sm:$0xff]
    %v794 = vld [vmem:[#allocation8 + $0x778] sm:$0xff]
    %v795 = vld [vmem:[#allocation8 + $0x780] sm:$0xff]
    %v796 = vld [vmem:[#allocation8 + $0x788] sm:$0xff]
    %v797 = vld [vmem:[#allocation8 + $0x790] sm:$0xff]
    %v798 = vld [vmem:[#allocation8 + $0x798] sm:$0xff]
    %v799 = vld [vmem:[#allocation8 + $0x7a0] sm:$0xff]
    %v800 = vld [vmem:[#allocation8 + $0x7a8] sm:$0xff]
    %v801 = vld [vmem:[#allocation8 + $0x7b0] sm:$0xff]
    %v802 = vld [vmem:[#allocation8 + $0x7b8] sm:$0xff]
    %v803 = vld [vmem:[#allocation8 + $0x7c0] sm:$0xff]
    %v804 = vld [vmem:[#allocation8 + $0x7c8] sm:$0xff]
    %v805 = vld [vmem:[#allocation8 + $0x7d0] sm:$0xff]
    %v806 = vld [vmem:[#allocation8 + $0x7d8] sm:$0xff]
    %v807 = vld [vmem:[#allocation8 + $0x7e0] sm:$0xff]
    %v808 = vld [vmem:[#allocation8 + $0x7e8] sm:$0xff]
    %v809 = vld [vmem:[#allocation8 + $0x7f0] sm:$0xff]
    %v810 = vld [vmem:[#allocation8 + $0x7f8] sm:$0xff]
    %v811 = vld [vmem:[#allocation10] sm:$0xff]
    %v812 = vld [vmem:[#allocation10 + $0x8] sm:$0xff]
    %813 = vmatpush.msra.mxu0 0.0
    %814 = vmatpush.msra.mxu0 0.0
    %815 = vmatpush.msra.mxu0 0.0
    %816 = vmatpush.msra.mxu0 0.0
    %817 = vmatpush.msra.mxu0 0.0
    %818 = vmatpush.msra.mxu0 0.0
    %819 = vmatpush.msra.mxu0 0.0
    %820 = vmatpush.msra.mxu0 0.0
    %821 = vmatpush.msra.mxu0 0.0
    %822 = vmatpush.msra.mxu0 0.0
    %823 = vmatpush.msra.mxu0 0.0
    %824 = vmatpush.msra.mxu0 0.0
    %825 = vmatpush.msra.mxu0 0.0
    %826 = vmatpush.msra.mxu0 0.0
    %827 = vmatpush.msra.mxu0 %v812
    %828 = vmatpush.msra.mxu0 %v811
    %829 = vmatmul.f32.gmra.mxu0 %v217
    %v830 = vpop.f32.mrf.mxu0
    %v831 = vadd.f32 0.0, %v830
    %832 = vdwg.mxu0
    %833 = vmatpush.msra.mxu0 %v570
    %834 = vmatpush.msra.mxu0 %v569
    %835 = vmatpush.msra.mxu0 %v568
    %836 = vmatpush.msra.mxu0 %v567
    %837 = vmatpush.msra.mxu0 %v566
    %838 = vmatpush.msra.mxu0 %v565
    %839 = vmatpush.msra.mxu0 %v564
    %840 = vmatpush.msra.mxu0 %v563
    %841 = vmatpush.msra.mxu0 %v562
    %842 = vmatpush.msra.mxu0 %v561
    %843 = vmatpush.msra.mxu0 %v560
    %844 = vmatpush.msra.mxu0 %v559
    %845 = vmatpush.msra.mxu0 %v558
    %846 = vmatpush.msra.mxu0 %v557
    %847 = vmatpush.msra.mxu0 %v556
    %848 = vmatpush.msra.mxu0 %v555
    %849 = vmatmul.f32.gmra.mxu0 %v539
    %v850 = vpop.f32.mrf.mxu0
    %v851 = vadd.f32 %v831, %v850
    %852 = vdwg.mxu0
    %853 = vmatpush.msra.mxu0 %v586
    %854 = vmatpush.msra.mxu0 %v585
    %855 = vmatpush.msra.mxu0 %v584
    %856 = vmatpush.msra.mxu0 %v583
    %857 = vmatpush.msra.mxu0 %v582
    %858 = vmatpush.msra.mxu0 %v581
    %859 = vmatpush.msra.mxu0 %v580
    %860 = vmatpush.msra.mxu0 %v579
    %861 = vmatpush.msra.mxu0 %v578
    %862 = vmatpush.msra.mxu0 %v577
    %863 = vmatpush.msra.mxu0 %v576
    %864 = vmatpush.msra.mxu0 %v575
    %865 = vmatpush.msra.mxu0 %v574
    %866 = vmatpush.msra.mxu0 %v573
    %867 = vmatpush.msra.mxu0 %v572
    %868 = vmatpush.msra.mxu0 %v571
    %869 = vmatmul.f32.gmra.mxu0 %v540
    %v870 = vpop.f32.mrf.mxu0
    %v871 = vadd.f32 %v851, %v870
    %872 = vdwg.mxu0
    %873 = vmatpush.msra.mxu0 %v602
    %874 = vmatpush.msra.mxu0 %v601
    %875 = vmatpush.msra.mxu0 %v600
    %876 = vmatpush.msra.mxu0 %v599
    %877 = vmatpush.msra.mxu0 %v598
    %878 = vmatpush.msra.mxu0 %v597
    %879 = vmatpush.msra.mxu0 %v596
    %880 = vmatpush.msra.mxu0 %v595
    %881 = vmatpush.msra.mxu0 %v594
    %882 = vmatpush.msra.mxu0 %v593
    %883 = vmatpush.msra.mxu0 %v592
    %884 = vmatpush.msra.mxu0 %v591
    %885 = vmatpush.msra.mxu0 %v590
    %886 = vmatpush.msra.mxu0 %v589
    %887 = vmatpush.msra.mxu0 %v588
    %888 = vmatpush.msra.mxu0 %v587
    %889 = vmatmul.f32.gmra.mxu0 %v541
    %v890 = vpop.f32.mrf.mxu0
    %v891 = vadd.f32 %v871, %v890
    %892 = vdwg.mxu0
    %893 = vmatpush.msra.mxu0 %v618
    %894 = vmatpush.msra.mxu0 %v617
    %895 = vmatpush.msra.mxu0 %v616
    %896 = vmatpush.msra.mxu0 %v615
    %897 = vmatpush.msra.mxu0 %v614
    %898 = vmatpush.msra.mxu0 %v613
    %899 = vmatpush.msra.mxu0 %v612
    %900 = vmatpush.msra.mxu0 %v611
    %901 = vmatpush.msra.mxu0 %v610
    %902 = vmatpush.msra.mxu0 %v609
    %903 = vmatpush.msra.mxu0 %v608
    %904 = vmatpush.msra.mxu0 %v607
    %905 = vmatpush.msra.mxu0 %v606
    %906 = vmatpush.msra.mxu0 %v605
    %907 = vmatpush.msra.mxu0 %v604
    %908 = vmatpush.msra.mxu0 %v603
    %909 = vmatmul.f32.gmra.mxu0 %v542
    %v910 = vpop.f32.mrf.mxu0
    %v911 = vadd.f32 %v891, %v910
    %912 = vdwg.mxu0
    %913 = vmatpush.msra.mxu0 %v634
    %914 = vmatpush.msra.mxu0 %v633
    %915 = vmatpush.msra.mxu0 %v632
    %916 = vmatpush.msra.mxu0 %v631
    %917 = vmatpush.msra.mxu0 %v630
    %918 = vmatpush.msra.mxu0 %v629
    %919 = vmatpush.msra.mxu0 %v628
    %920 = vmatpush.msra.mxu0 %v627
    %921 = vmatpush.msra.mxu0 %v626
    %922 = vmatpush.msra.mxu0 %v625
    %923 = vmatpush.msra.mxu0 %v624
    %924 = vmatpush.msra.mxu0 %v623
    %925 = vmatpush.msra.mxu0 %v622
    %926 = vmatpush.msra.mxu0 %v621
    %927 = vmatpush.msra.mxu0 %v620
    %928 = vmatpush.msra.mxu0 %v619
    %929 = vmatmul.f32.gmra.mxu0 %v543
    %v930 = vpop.f32.mrf.mxu0
    %v931 = vadd.f32 %v911, %v930
    %932 = vdwg.mxu0
    %933 = vmatpush.msra.mxu0 %v650
    %934 = vmatpush.msra.mxu0 %v649
    %935 = vmatpush.msra.mxu0 %v648
    %936 = vmatpush.msra.mxu0 %v647
    %937 = vmatpush.msra.mxu0 %v646
    %938 = vmatpush.msra.mxu0 %v645
    %939 = vmatpush.msra.mxu0 %v644
    %940 = vmatpush.msra.mxu0 %v643
    %941 = vmatpush.msra.mxu0 %v642
    %942 = vmatpush.msra.mxu0 %v641
    %943 = vmatpush.msra.mxu0 %v640
    %944 = vmatpush.msra.mxu0 %v639
    %945 = vmatpush.msra.mxu0 %v638
    %946 = vmatpush.msra.mxu0 %v637
    %947 = vmatpush.msra.mxu0 %v636
    %948 = vmatpush.msra.mxu0 %v635
    %949 = vmatmul.f32.gmra.mxu0 %v544
    %v950 = vpop.f32.mrf.mxu0
    %v951 = vadd.f32 %v931, %v950
    %952 = vdwg.mxu0
    %953 = vmatpush.msra.mxu0 %v666
    %954 = vmatpush.msra.mxu0 %v665
    %955 = vmatpush.msra.mxu0 %v664
    %956 = vmatpush.msra.mxu0 %v663
    %957 = vmatpush.msra.mxu0 %v662
    %958 = vmatpush.msra.mxu0 %v661
    %959 = vmatpush.msra.mxu0 %v660
    %960 = vmatpush.msra.mxu0 %v659
    %961 = vmatpush.msra.mxu0 %v658
    %962 = vmatpush.msra.mxu0 %v657
    %963 = vmatpush.msra.mxu0 %v656
    %964 = vmatpush.msra.mxu0 %v655
    %965 = vmatpush.msra.mxu0 %v654
    %966 = vmatpush.msra.mxu0 %v653
    %967 = vmatpush.msra.mxu0 %v652
    %968 = vmatpush.msra.mxu0 %v651
    %969 = vmatmul.f32.gmra.mxu0 %v545
    %v970 = vpop.f32.mrf.mxu0
    %v971 = vadd.f32 %v951, %v970
    %972 = vdwg.mxu0
    %973 = vmatpush.msra.mxu0 %v682
    %974 = vmatpush.msra.mxu0 %v681
    %975 = vmatpush.msra.mxu0 %v680
    %976 = vmatpush.msra.mxu0 %v679
    %977 = vmatpush.msra.mxu0 %v678
    %978 = vmatpush.msra.mxu0 %v677
    %979 = vmatpush.msra.mxu0 %v676
    %980 = vmatpush.msra.mxu0 %v675
    %981 = vmatpush.msra.mxu0 %v674
    %982 = vmatpush.msra.mxu0 %v673
    %983 = vmatpush.msra.mxu0 %v672
    %984 = vmatpush.msra.mxu0 %v671
    %985 = vmatpush.msra.mxu0 %v670
    %986 = vmatpush.msra.mxu0 %v669
    %987 = vmatpush.msra.mxu0 %v668
    %988 = vmatpush.msra.mxu0 %v667
    %989 = vmatmul.f32.gmra.mxu0 %v546
    %v990 = vpop.f32.mrf.mxu0
    %v991 = vadd.f32 %v971, %v990
    %992 = vdwg.mxu0
    %993 = vmatpush.msra.mxu0 %v698
    %994 = vmatpush.msra.mxu0 %v697
    %995 = vmatpush.msra.mxu0 %v696
    %996 = vmatpush.msra.mxu0 %v695
    %997 = vmatpush.msra.mxu0 %v694
    %998 = vmatpush.msra.mxu0 %v693
    %999 = vmatpush.msra.mxu0 %v692
    %1000 = vmatpush.msra.mxu0 %v691
    %1001 = vmatpush.msra.mxu0 %v690
    %1002 = vmatpush.msra.mxu0 %v689
    %1003 = vmatpush.msra.mxu0 %v688
    %1004 = vmatpush.msra.mxu0 %v687
    %1005 = vmatpush.msra.mxu0 %v686
    %1006 = vmatpush.msra.mxu0 %v685
    %1007 = vmatpush.msra.mxu0 %v684
    %1008 = vmatpush.msra.mxu0 %v683
    %1009 = vmatmul.f32.gmra.mxu0 %v547
    %v1010 = vpop.f32.mrf.mxu0
    %v1011 = vadd.f32 %v991, %v1010
    %1012 = vdwg.mxu0
    %1013 = vmatpush.msra.mxu0 %v714
    %1014 = vmatpush.msra.mxu0 %v713
    %1015 = vmatpush.msra.mxu0 %v712
    %1016 = vmatpush.msra.mxu0 %v711
    %1017 = vmatpush.msra.mxu0 %v710
    %1018 = vmatpush.msra.mxu0 %v709
    %1019 = vmatpush.msra.mxu0 %v708
    %1020 = vmatpush.msra.mxu0 %v707
    %1021 = vmatpush.msra.mxu0 %v706
    %1022 = vmatpush.msra.mxu0 %v705
    %1023 = vmatpush.msra.mxu0 %v704
    %1024 = vmatpush.msra.mxu0 %v703
    %1025 = vmatpush.msra.mxu0 %v702
    %1026 = vmatpush.msra.mxu0 %v701
    %1027 = vmatpush.msra.mxu0 %v700
    %1028 = vmatpush.msra.mxu0 %v699
    %1029 = vmatmul.f32.gmra.mxu0 %v548
    %v1030 = vpop.f32.mrf.mxu0
    %v1031 = vadd.f32 %v1011, %v1030
    %1032 = vdwg.mxu0
    %1033 = vmatpush.msra.mxu0 %v730
    %1034 = vmatpush.msra.mxu0 %v729
    %1035 = vmatpush.msra.mxu0 %v728
    %1036 = vmatpush.msra.mxu0 %v727
    %1037 = vmatpush.msra.mxu0 %v726
    %1038 = vmatpush.msra.mxu0 %v725
    %1039 = vmatpush.msra.mxu0 %v724
    %1040 = vmatpush.msra.mxu0 %v723
    %1041 = vmatpush.msra.mxu0 %v722
    %1042 = vmatpush.msra.mxu0 %v721
    %1043 = vmatpush.msra.mxu0 %v720
    %1044 = vmatpush.msra.mxu0 %v719
    %1045 = vmatpush.msra.mxu0 %v718
    %1046 = vmatpush.msra.mxu0 %v717
    %1047 = vmatpush.msra.mxu0 %v716
    %1048 = vmatpush.msra.mxu0 %v715
    %1049 = vmatmul.f32.gmra.mxu0 %v549
    %v1050 = vpop.f32.mrf.mxu0
    %v1051 = vadd.f32 %v1031, %v1050
    %1052 = vdwg.mxu0
    %1053 = vmatpush.msra.mxu0 %v746
    %1054 = vmatpush.msra.mxu0 %v745
    %1055 = vmatpush.msra.mxu0 %v744
    %1056 = vmatpush.msra.mxu0 %v743
    %1057 = vmatpush.msra.mxu0 %v742
    %1058 = vmatpush.msra.mxu0 %v741
    %1059 = vmatpush.msra.mxu0 %v740
    %1060 = vmatpush.msra.mxu0 %v739
    %1061 = vmatpush.msra.mxu0 %v738
    %1062 = vmatpush.msra.mxu0 %v737
    %1063 = vmatpush.msra.mxu0 %v736
    %1064 = vmatpush.msra.mxu0 %v735
    %1065 = vmatpush.msra.mxu0 %v734
    %1066 = vmatpush.msra.mxu0 %v733
    %1067 = vmatpush.msra.mxu0 %v732
    %1068 = vmatpush.msra.mxu0 %v731
    %1069 = vmatmul.f32.gmra.mxu0 %v550
    %v1070 = vpop.f32.mrf.mxu0
    %v1071 = vadd.f32 %v1051, %v1070
    %1072 = vdwg.mxu0
    %1073 = vmatpush.msra.mxu0 %v762
    %1074 = vmatpush.msra.mxu0 %v761
    %1075 = vmatpush.msra.mxu0 %v760
    %1076 = vmatpush.msra.mxu0 %v759
    %1077 = vmatpush.msra.mxu0 %v758
    %1078 = vmatpush.msra.mxu0 %v757
    %1079 = vmatpush.msra.mxu0 %v756
    %1080 = vmatpush.msra.mxu0 %v755
    %1081 = vmatpush.msra.mxu0 %v754
    %1082 = vmatpush.msra.mxu0 %v753
    %1083 = vmatpush.msra.mxu0 %v752
    %1084 = vmatpush.msra.mxu0 %v751
    %1085 = vmatpush.msra.mxu0 %v750
    %1086 = vmatpush.msra.mxu0 %v749
    %1087 = vmatpush.msra.mxu0 %v748
    %1088 = vmatpush.msra.mxu0 %v747
    %1089 = vmatmul.f32.gmra.mxu0 %v551
    %v1090 = vpop.f32.mrf.mxu0
    %v1091 = vadd.f32 %v1071, %v1090
    %1092 = vdwg.mxu0
    %1093 = vmatpush.msra.mxu0 %v778
    %1094 = vmatpush.msra.mxu0 %v777
    %1095 = vmatpush.msra.mxu0 %v776
    %1096 = vmatpush.msra.mxu0 %v775
    %1097 = vmatpush.msra.mxu0 %v774
    %1098 = vmatpush.msra.mxu0 %v773
    %1099 = vmatpush.msra.mxu0 %v772
    %1100 = vmatpush.msra.mxu0 %v771
    %1101 = vmatpush.msra.mxu0 %v770
    %1102 = vmatpush.msra.mxu0 %v769
    %1103 = vmatpush.msra.mxu0 %v768
    %1104 = vmatpush.msra.mxu0 %v767
    %1105 = vmatpush.msra.mxu0 %v766
    %1106 = vmatpush.msra.mxu0 %v765
    %1107 = vmatpush.msra.mxu0 %v764
    %1108 = vmatpush.msra.mxu0 %v763
    %1109 = vmatmul.f32.gmra.mxu0 %v552
    %v1110 = vpop.f32.mrf.mxu0
    %v1111 = vadd.f32 %v1091, %v1110
    %1112 = vdwg.mxu0
    %1113 = vmatpush.msra.mxu0 %v794
    %1114 = vmatpush.msra.mxu0 %v793
    %1115 = vmatpush.msra.mxu0 %v792
    %1116 = vmatpush.msra.mxu0 %v791
    %1117 = vmatpush.msra.mxu0 %v790
    %1118 = vmatpush.msra.mxu0 %v789
    %1119 = vmatpush.msra.mxu0 %v788
    %1120 = vmatpush.msra.mxu0 %v787
    %1121 = vmatpush.msra.mxu0 %v786
    %1122 = vmatpush.msra.mxu0 %v785
    %1123 = vmatpush.msra.mxu0 %v784
    %1124 = vmatpush.msra.mxu0 %v783
    %1125 = vmatpush.msra.mxu0 %v782
    %1126 = vmatpush.msra.mxu0 %v781
    %1127 = vmatpush.msra.mxu0 %v780
    %1128 = vmatpush.msra.mxu0 %v779
    %1129 = vmatmul.f32.gmra.mxu0 %v553
    %v1130 = vpop.f32.mrf.mxu0
    %v1131 = vadd.f32 %v1111, %v1130
    %1132 = vdwg.mxu0
    %1133 = vmatpush.msra.mxu0 %v810
    %1134 = vmatpush.msra.mxu0 %v809
    %1135 = vmatpush.msra.mxu0 %v808
    %1136 = vmatpush.msra.mxu0 %v807
    %1137 = vmatpush.msra.mxu0 %v806
    %1138 = vmatpush.msra.mxu0 %v805
    %1139 = vmatpush.msra.mxu0 %v804
    %1140 = vmatpush.msra.mxu0 %v803
    %1141 = vmatpush.msra.mxu0 %v802
    %1142 = vmatpush.msra.mxu0 %v801
    %1143 = vmatpush.msra.mxu0 %v800
    %1144 = vmatpush.msra.mxu0 %v799
    %1145 = vmatpush.msra.mxu0 %v798
    %1146 = vmatpush.msra.mxu0 %v797
    %1147 = vmatpush.msra.mxu0 %v796
    %1148 = vmatpush.msra.mxu0 %v795
    %1149 = vmatmul.f32.gmra.mxu0 %v554
    %v1150 = vpop.f32.mrf.mxu0
    %v1151 = vadd.f32 %v1131, %v1150
    %1152 = vdwg.mxu0
    %v1153 = vld [vmem:[%s5] sm:$0x1]
    %v1155 = vperm.slane %v1153, 0
    %v1157 = vadd.f32 %v1151, %v1155
    %v1158 = vmul.f32 %v1157, %v132
    %v1159 = vadd.f32 %v1158, %v113
    %v1160 = vld [vmem:[%s6] sm:$0x3]
    %vm1161 = vcmask 64512
    %v1163 = vsel %vm1161, %v1160, 0
    %1165 = vmatpush.msra.mxu0 0.0
    %1166 = vmatpush.msra.mxu0 0.0
    %1167 = vmatpush.msra.mxu0 0.0
    %1168 = vmatpush.msra.mxu0 0.0
    %1169 = vmatpush.msra.mxu0 0.0
    %1170 = vmatpush.msra.mxu0 0.0
    %1171 = vmatpush.msra.mxu0 0.0
    %1172 = vmatpush.msra.mxu0 0.0
    %1173 = vmatpush.msra.mxu0 0.0
    %1174 = vmatpush.msra.mxu0 0.0
    %1175 = vmatpush.msra.mxu0 0.0
    %1176 = vmatpush.msra.mxu0 0.0
    %1177 = vmatpush.msra.mxu0 0.0
    %1178 = vmatpush.msra.mxu0 0.0
    %1179 = vmatpush.msra.mxu0 0.0
    %1180 = vmatpush.msra.mxu0 %v1159
    %1181 = vmatmul.f32.gmra.mxu0 %v1163
    %v1182 = vpop.f32.mrf.mxu0
    %v1183 = vadd.f32 0.0, %v1182
    %1184 = vdwg.mxu0
    %vm1185 = vcmask 58368
    %1186 = vst.msk [vmem:[#allocation11] sm:$0x3] %vm1185, %v1183
    // Predicated region
    $region50: #{model_forward.1} parent=1 // pred_check
      _
    $region51: #{model_forward.1} parent=1 // pred_check_branch
      %1188 = sbr.rel (0) target = $region53
    $region52: #{model_forward.1} parent=1 // pred_region
      %1190 = vsyncadd [#allocation4], 0
      %s1192 = sshll.u32 [#allocation11], 4
      %s1193 = int_to_ptr.vmem [resolvable:$true] %s1192
      %s1194 = sshll.u32 %s7, 4
      %s1195 = int_to_ptr.hbm [resolvable:$true] %s1194
      %1197 = dma.vmem_to_hbm [thread:$0]  %s1193, 32, %s1195, [#allocation4]
    $region53: #{model_forward.1} parent=1 // pred_fallthru
      _
    // Predicated region
    $region54: #{model_forward.1} parent=1 // pred_check
      _
    $region55: #{model_forward.1} parent=1 // pred_check_branch
      %1199 = sbr.rel (0) target = $region57
    $region56: #{model_forward.1} parent=1 // pred_region
      %1201 = dma.done [#allocation4], 32
    $region57: #{model_forward.1} parent=1 // pred_fallthru
      _
    %1202 = vsyncpa [#allocation3], 1
    %1203 = vsyncpa [#allocation6], 1
    %1204 = vsyncpa [#allocation9], 1
    %1205 = vsyncpa [#allocation4], 1

</llo_original>
